<compile_context>
chip_gen: v7x
topology: tpu7x:2x2x1
jax: 0.10.0
libtpu: 0.0.40
codegen_flags: <defaults>
</compile_context>

<pallas_src>
import functools

import numpy as np
import jax
import jax.numpy as jnp
from jax.experimental import pallas as pl
from jax.experimental.pallas import tpu as pltpu


def _superpixel_kernel(x_ref, s_ref, o_ref):
    # x_ref: (m_tile, L)        rows = flattened (batch, channel)
    # s_ref: (L, r*L_out)       one-hot gather matrix (reflect pad folded in)
    # o_ref: (m_tile, r*L_out)
    o_ref[...] = jnp.dot(
        x_ref[...], s_ref[...], preferred_element_type=jnp.float32
    ).astype(o_ref.dtype)


@functools.lru_cache(maxsize=None)
def _selection_matrix(L: int, r: int, dtype_name: str):
    """(L, r*L_out) one-hot matrix folding right-side reflect pad + stride-r de-interleave.

    Output flat column col = j*L_out + i  <->  padded input position p = i*r + j, with
    right-side reflect padding: p >= L maps to 2*L - 2 - p.  Each column has exactly one
    nonzero, so the f32-accumulated selection matmul is numerically exact.
    Built on host once per (L, r, dtype) and cached as a device constant.
    """
    L_out = -(-L // r)
    Kcols = r * L_out
    col = np.arange(Kcols)
    j = col // L_out
    i = col % L_out
    p = i * r + j
    src = np.where(p < L, p, 2 * L - 2 - p)                         # (Kcols,)
    S = (np.arange(L)[:, None] == src[None, :]).astype(dtype_name)  # (L, Kcols)
    return jnp.asarray(S)


def _superpixel_xla(x, r):
    """Pure-JAX transcription of the PyTorch Superpixel.forward (also the small-shape path)."""
    N, C, L = x.shape
    r_pad = (-L) % r
    xp = jnp.pad(x, ((0, 0), (0, 0), (0, r_pad)), mode="reflect") if r_pad else x
    Lp = L + r_pad
    return (
        xp.reshape(N, C, Lp // r, r)
        .transpose(0, 1, 3, 2)
        .reshape(N, C * r, Lp // r)
    )


def superpixel(x, r_superpixel, *, m_tile=None, force_pallas=False):
    """x: (N, C, L) -> (N, C * r, ceil(L / r)), matching torch Superpixel.forward."""
    r = int(r_superpixel)
    N, C, L = x.shape
    r_pad = (-L) % r
    assert r_pad < L, "reflect padding requires pad < sequence length"
    L_out = (L + r_pad) // r
    Kcols = r * L_out
    M = N * C

    # Small-shape fallback: lane-sparse output (<128 wide) and/or tiny traffic means the
    # pallas_call fixed overhead dominates; let XLA do the reshape/transpose.
    if not force_pallas and (Kcols < 128 or M * L < (1 << 20)):
        return _superpixel_xla(x, r)

    itemsize = jnp.dtype(x.dtype).itemsize
    S = _selection_matrix(L, r, jnp.dtype(x.dtype).name)

    # --- tile sizing from a VMEM budget ------------------------------------------------
    # Budget: double-buffered x tile + double-buffered out tile + S (x2 buffers, since it
    # is a blocked operand with a constant index_map).  Stay well inside the smallest
    # physical VMEM across generations (v7x: 64 MiB).
    VMEM_BUDGET = 40 << 20
    if m_tile is None:
        per_row = 2 * (L + Kcols) * itemsize
        s_bytes = 2 * L * Kcols * itemsize
        cap = max(VMEM_BUDGET - s_bytes, 8 * per_row) // per_row
        cap = int(max(8, min(1024, (cap // 8) * 8)))
        if M <= 16:
            m_tile = M                       # single full-extent block (legal: == array dim)
        else:
            # Aim for >= 8 grid steps (v7x megacore sharding + DMA/compute overlap) with
            # tiles a multiple of 8 sublanes, capped by the VMEM budget.
            target = -(-M // 8)
            target = -(-target // 8) * 8
            m_tile = max(8, min(cap, target))

    grid = (pl.cdiv(M, m_tile),)   # ragged last block: out-of-bounds stores are masked

    vmem_needed = (2 * m_tile * (L + Kcols) + 2 * L * Kcols) * itemsize
    vmem_limit = max(16 << 20, min(48 << 20, vmem_needed * 5 // 4 + (2 << 20)))
    vmem_limit = int(max(vmem_limit, vmem_needed + (1 << 20)))

    # Fold batch and channels into the matmul M dimension (free reshape, data contiguous).
    x2 = x.reshape(M, L)

    out2 = pl.pallas_call(
        _superpixel_kernel,
        out_shape=jax.ShapeDtypeStruct((M, Kcols), x.dtype),
        grid=grid,
        in_specs=[
            pl.BlockSpec((m_tile, L), lambda m: (m, 0)),
            pl.BlockSpec((L, Kcols), lambda m: (0, 0)),   # constant index -> fetched once
        ],
        out_specs=pl.BlockSpec((m_tile, Kcols), lambda m: (m, 0)),
        compiler_params=pltpu.CompilerParams(
            dimension_semantics=("parallel",),
            vmem_limit_bytes=vmem_limit,
        ),
        cost_estimate=pl.CostEstimate(
            flops=2 * M * L * Kcols,
            bytes_accessed=(M * L + L * Kcols + M * Kcols) * itemsize,
            transcendentals=0,
        ),
    )(x2, S)

    # (N*C, r*L_out) -> (N, C*r, L_out) is a free, order-preserving reshape.
    return out2.reshape(N, C * r, L_out)


if __name__ == "__main__":
    # Module config: r_superpixel = 3; input (N, C, L) = (2, 4, 16) -> output (2, 12, 6)
    # (L = 16 is not a multiple of 3, so the reflect-pad path is exercised).
    r_superpixel = 3
    N, C, L = 2, 4, 16

    key = jax.random.PRNGKey(0)
    x = jax.random.normal(key, (N, C, L), dtype=jnp.float32)

    ref = _superpixel_xla(x, r_superpixel)
    L_out = (L + (-L) % r_superpixel) // r_superpixel

    # Pallas path (forced, since this shape is below the XLA-fallback threshold).
    out = superpixel(x, r_superpixel, force_pallas=True)
    jax.block_until_ready(out)
    assert out.shape == (N, C * r_superpixel, L_out)
    assert jnp.allclose(out, ref, atol=1e-5, rtol=1e-5)

    # Auto path (dispatches to the XLA fallback at this tiny shape) — same result.
    out_auto = superpixel(x, r_superpixel)
    jax.block_until_ready(out_auto)
    assert jnp.allclose(out_auto, ref, atol=1e-5, rtol=1e-5)

    print("KERNEL_OK")
</pallas_src>

<mosaic_0001>
module attributes {stable_mosaic.version = 11 : i64} {
  func.func @_superpixel_kernel(%arg0: i32, %arg1: memref<8x16xf32, #tpu.memory_space<vmem>>, %arg2: memref<16x18xf32, #tpu.memory_space<vmem>>, %arg3: memref<8x18xf32, #tpu.memory_space<vmem>>) attributes {dimension_semantics = [#tpu.dimension_semantics<parallel>], iteration_bounds = array<i64: 1>, scalar_prefetch = 0 : i64, scratch_operands = 0 : i64, tpu.core_type = #tpu.core_type<tc>, window_params = [{transform_indices = @transform_0, window_bounds = array<i64: 8, 16>}, {pipeline_mode = #tpu.pipeline_mode<synchronous>, transform_indices = @transform_1, window_bounds = array<i64: 16, 18>}, {transform_indices = @transform_2, window_bounds = array<i64: 8, 18>}]} {
    %c0 = arith.constant 0 : index
    %c0_0 = arith.constant 0 : index
    %0 = vector.load %arg1[%c0, %c0_0] : memref<8x16xf32, #tpu.memory_space<vmem>>, vector<8x16xf32>
    %c0_1 = arith.constant 0 : index
    %c0_2 = arith.constant 0 : index
    %1 = vector.load %arg2[%c0_1, %c0_2] : memref<16x18xf32, #tpu.memory_space<vmem>>, vector<16x18xf32>
    %cst = arith.constant dense<0.000000e+00> : vector<8x18xf32>
    %2 = tpu.matmul %0, %1, %cst {dimension_numbers = #tpu.dot_dimension_numbers<[1], [0], [0], [1], [0, 0, 1, 1], [], []>} : vector<8x16xf32>, vector<16x18xf32>, vector<8x18xf32> -> vector<8x18xf32>
    %c0_3 = arith.constant 0 : index
    %c0_4 = arith.constant 0 : index
    %3 = vector.load %arg3[%c0_3, %c0_4] : memref<8x18xf32, #tpu.memory_space<vmem>>, vector<8x18xf32>
    tpu.vector_store %arg3[%c0_3, %c0_4], %2 {strides = array<i32>} : memref<8x18xf32, #tpu.memory_space<vmem>>, vector<8x18xf32>,
    return
  }
  func.func @transform_0(%arg0: i32) -> (i32, i32) {
    %c0_i32 = arith.constant 0 : i32
    %c0_i32_0 = arith.constant 0 : i32
    return %arg0, %c0_i32 : i32, i32
  }
  func.func @transform_1(%arg0: i32) -> (i32, i32) {
    %c0_i32 = arith.constant 0 : i32
    %c0_i32_0 = arith.constant 0 : i32
    %c0_i32_1 = arith.constant 0 : i32
    return %c0_i32, %c0_i32_0 : i32, i32
  }
  func.func @transform_2(%arg0: i32) -> (i32, i32) {
    %c0_i32 = arith.constant 0 : i32
    %c0_i32_0 = arith.constant 0 : i32
    return %arg0, %c0_i32 : i32, i32
  }
}

</mosaic_0001>

<llo_original>
// kernel: tpu_custom_call.1
$region0: #{tpu_custom_call.1}
  #allocation0 [shape = 'u32[]', space=smem, size = 0x4, offset = 0x4, fixed_abs, tag = 'smem constant byte address 0x4 - core index']
  #allocation1 [shape = 'u32[144,128]{1,0:T(1,128)}', space=vmem, size = 0x12000, scoped, tag = 'internal scratch']
  %s0 = inlined_call_operand.hbm [shape: f32[8,16], index: 0, kind: input, shape index: {}]
  %s1 = inlined_call_operand.hbm [shape: f32[16,18], index: 1, kind: input, shape index: {}]
  %s2 = inlined_call_operand.hbm [shape: f32[8,18], index: 2, kind: output, shape index: {}]
  %s3 = sld [smem:[#allocation0]]
  $region26: #{tpu_custom_call.1} parent=0
    _
  %s5 = ssub.s32 1, %s3
  %s6 = scalar_select 0, %s5, %s3
  $region1: #{tpu_custom_call.1} parent=0
    #allocation2 [shape = 'u8[4096]{0}', space=vmem, size = 0x1000, scoped, tag = 'input window, operand 0, single buffered']
    #allocation3 [shape = 's32[1]{0}', space=sflag, size = 0x4, scoped, tag = 'scoped memory for tpu_custom_call.1']
    #allocation4 [shape = 's32[1]{0}', space=sflag, size = 0x4, scoped, tag = 'scoped memory for tpu_custom_call.1']
    #allocation5 [shape = 'u8[8192]{0}', space=vmem, size = 0x2000, scoped, tag = 'input window, operand 1, single buffered']
    #allocation6 [shape = 's32[1]{0}', space=sflag, size = 0x4, scoped, tag = 'scoped memory for tpu_custom_call.1']
    #allocation7 [shape = 'u8[4096]{0}', space=vmem, size = 0x1000, scoped, tag = 'output window, operand 0, single buffered']
    %7 = vsyncpa [#allocation3], 0
    %8 = vsyncpa [#allocation6], 0
    %9 = vsyncpa [#allocation4], 0
    // Predicated region
    $region2: #{tpu_custom_call.1} parent=1 // pred_check
      _
    $region3: #{tpu_custom_call.1} parent=1 // pred_check_branch
      %11 = sbr.rel (0) target = $region5
    $region4: #{tpu_custom_call.1} parent=1 // pred_region
      %s13 = ssub.s32 128, 128
      %14 = vsyncadd [#allocation3], %s13
      %s16 = sshll.u32 [#allocation2], 4
      %s17 = int_to_ptr.vmem [resolvable:$true] %s16
      %19 = dma.hbm_to_vmem [thread:$0]  %s0, 128, %s17, [#allocation3]
    $region5: #{tpu_custom_call.1} parent=1 // pred_fallthru
      _
    // Predicated region
    $region6: #{tpu_custom_call.1} parent=1 // pred_check
      _
    $region7: #{tpu_custom_call.1} parent=1 // pred_check_branch
      %21 = sbr.rel (0) target = $region9
    $region8: #{tpu_custom_call.1} parent=1 // pred_region
      %s23 = ssub.s32 256, 256
      %24 = vsyncadd [#allocation6], %s23
      %s25 = sshll.u32 [#allocation5], 4
      %s26 = int_to_ptr.vmem [resolvable:$true] %s25
      %31 = dma.hbm_to_vmem [thread:$0]  %s1, 256, %s26, [#allocation6], 128, 128, 8
    $region9: #{tpu_custom_call.1} parent=1 // pred_fallthru
      _
    // Predicated region
    $region10: #{tpu_custom_call.1} parent=1 // pred_check
      _
    $region11: #{tpu_custom_call.1} parent=1 // pred_check_branch
      %33 = sbr.rel (0) target = $region13
    $region12: #{tpu_custom_call.1} parent=1 // pred_region
      %34 = dma.done [#allocation3], 128
    $region13: #{tpu_custom_call.1} parent=1 // pred_fallthru
      _
    // Predicated region
    $region14: #{tpu_custom_call.1} parent=1 // pred_check
      _
    $region15: #{tpu_custom_call.1} parent=1 // pred_check_branch
      %36 = sbr.rel (0) target = $region17
    $region16: #{tpu_custom_call.1} parent=1 // pred_region
      %37 = dma.done [#allocation6], 256
    $region17: #{tpu_custom_call.1} parent=1 // pred_fallthru
      _
    %v38 = vld [vmem:[#allocation2] sm:$0xff]
    %v39 = vld [vmem:[#allocation5] sm:$0xff]
    %v40 = vld [vmem:[#allocation5 + $0x8] sm:$0xff]
    %vm41 = vcmask 130048
    %v43 = vsel %vm41, %v38, 0
    %45 = vmatprep.subr.mxu0 0.0
    %46 = vmatpush1.msra.mxu0 %v39
    %47 = vmatprep.subr.mxu0 0.0
    %48 = vmatpush1.msra.mxu0 %v40
    %49 = vmatprep.subr.mxu0 0.0
    %50 = vmatpush1.msra.mxu0 0.0
    %51 = vmatprep.subr.mxu0 0.0
    %52 = vmatpush1.msra.mxu0 0.0
    %53 = vmatprep.subr.mxu0 0.0
    %54 = vmatpush1.msra.mxu0 0.0
    %55 = vmatprep.subr.mxu0 0.0
    %56 = vmatpush1.msra.mxu0 0.0
    %57 = vmatprep.subr.mxu0 0.0
    %58 = vmatpush1.msra.mxu0 0.0
    %59 = vmatprep.subr.mxu0 0.0
    %60 = vmatpush1.msra.mxu0 0.0
    %61 = vmatprep.subr.mxu0 0.0
    %62 = vmatpush1.msra.mxu0 0.0
    %63 = vmatprep.subr.mxu0 0.0
    %64 = vmatpush1.msra.mxu0 0.0
    %65 = vmatprep.subr.mxu0 0.0
    %66 = vmatpush1.msra.mxu0 0.0
    %67 = vmatprep.subr.mxu0 0.0
    %68 = vmatpush1.msra.mxu0 0.0
    %69 = vmatprep.subr.mxu0 0.0
    %70 = vmatpush1.msra.mxu0 0.0
    %71 = vmatprep.subr.mxu0 0.0
    %72 = vmatpush1.msra.mxu0 0.0
    %73 = vmatprep.subr.mxu0 0.0
    %74 = vmatpush1.msra.mxu0 0.0
    %75 = vmatprep.subr.mxu0 0.0
    %76 = vmatpush1.msra.mxu0 0.0
    %77 = vmatprep.subr.mxu0 0.0
    %78 = vmatpush1.msra.mxu0 0.0
    %79 = vmatprep.subr.mxu0 0.0
    %80 = vmatpush1.msra.mxu0 0.0
    %81 = vmatprep.subr.mxu0 0.0
    %82 = vmatpush1.msra.mxu0 0.0
    %83 = vmatprep.subr.mxu0 0.0
    %84 = vmatpush1.msra.mxu0 0.0
    %85 = vmatprep.subr.mxu0 0.0
    %86 = vmatpush1.msra.mxu0 0.0
    %87 = vmatprep.subr.mxu0 0.0
    %88 = vmatpush1.msra.mxu0 0.0
    %89 = vmatprep.subr.mxu0 0.0
    %90 = vmatpush1.msra.mxu0 0.0
    %91 = vmatprep.subr.mxu0 0.0
    %92 = vmatpush1.msra.mxu0 0.0
    %93 = vmatprep.subr.mxu0 0.0
    %94 = vmatpush1.msra.mxu0 0.0
    %95 = vmatprep.subr.mxu0 0.0
    %96 = vmatpush1.msra.mxu0 0.0
    %97 = vmatprep.subr.mxu0 0.0
    %98 = vmatpush1.msra.mxu0 0.0
    %99 = vmatprep.subr.mxu0 0.0
    %100 = vmatpush1.msra.mxu0 0.0
    %101 = vmatprep.subr.mxu0 0.0
    %102 = vmatpush1.msra.mxu0 0.0
    %103 = vmatprep.subr.mxu0 0.0
    %104 = vmatpush1.msra.mxu0 0.0
    %105 = vmatprep.subr.mxu0 0.0
    %106 = vmatpush1.msra.mxu0 0.0
    %107 = vmatprep.subr.mxu0 0.0
    %108 = vmatpush1.msra.mxu0 0.0
    %109 = vmatprep.mubr.f32.mxu0 0.0
    %110 = vmatmul.mubr.f32.gmra.mrb[0].mxu0 %v43
    %v111 = vpop.f32.mrb[0].mxu0
    %v112 = vadd.f32 0.0, %v111
    %v113 = vpop.f32.mrb[0].mxu0
    %114 = vdwg.mxu0
    %vm115 = vcmask 146432
    %116 = vst.msk [vmem:[#allocation7] sm:$0xff] %vm115, %v112
    // Predicated region
    $region18: #{tpu_custom_call.1} parent=1 // pred_check
      _
    $region19: #{tpu_custom_call.1} parent=1 // pred_check_branch
      %118 = sbr.rel (0) target = $region21
    $region20: #{tpu_custom_call.1} parent=1 // pred_region
      %s120 = ssub.s32 128, 128
      %121 = vsyncadd [#allocation4], %s120
      %s123 = sshll.u32 [#allocation7], 4
      %s124 = int_to_ptr.vmem [resolvable:$true] %s123
      %126 = dma.vmem_to_hbm [thread:$0]  %s124, 128, %s2, [#allocation4]
    $region21: #{tpu_custom_call.1} parent=1 // pred_fallthru
      _
    // Predicated region
    $region22: #{tpu_custom_call.1} parent=1 // pred_check
      _
    $region23: #{tpu_custom_call.1} parent=1 // pred_check_branch
      %128 = sbr.rel (0) target = $region25
    $region24: #{tpu_custom_call.1} parent=1 // pred_region
      %129 = dma.done [#allocation4], 128
    $region25: #{tpu_custom_call.1} parent=1 // pred_fallthru
      _
    %130 = vsyncpa [#allocation3], 1
    %131 = vsyncpa [#allocation6], 1
    %132 = vsyncpa [#allocation4], 1

</llo_original>
